<compile_context>
chip_gen: v5e
topology: v5e:2x2
jax: 0.10.0
libtpu: 0.0.40
codegen_flags: <defaults>
</compile_context>

<pallas_src>
import functools
import math

import jax
import jax.numpy as jnp
from jax.experimental import pallas as pl
from jax.experimental.pallas import tpu as pltpu

# Layer dims of EAS_net: 36 -> 128 -> 55 -> 66 -> 33 -> 22 -> 11 -> 1
DIMS = [36, 128, 55, 66, 33, 22, 11, 1]
PAD = 128          # padded hidden width (lane dim)
MAX_TB = 2048      # max batch tile (sublane dim)
MIN_TB = 16        # bf16 sublane-packing friendly minimum tile


def _round_up(n, m):
    return ((n + m - 1) // m) * m


def _choose_tiling(B):
    """Pick (TB, Bp): balanced tiles, >=2 (even #) grid steps when B allows.

    - n tiles ~ ceil(B / MAX_TB), but at least 2 once each tile would hold
      real work (so both v7x TensorCores get a share), rounded up to an even
      count for balanced 2-core sharding.
    - TB = ceil(B / n) rounded to MIN_TB -> padded rows stay small.
    """
    n = -(-B // MAX_TB)
    if B >= 2 * MIN_TB:
        n = max(n, 2)
    if n > 1 and (n % 2):
        n += 1
    TB = _round_up(-(-B // n), MIN_TB)
    Bp = TB * n
    return TB, Bp


def init_raw_params(key):
    """PyTorch nn.Linear default init: U(-1/sqrt(fan_in), +1/sqrt(fan_in)).
    Weights stored as (in, out) so forward is x @ W + b."""
    raw = []
    for li in range(len(DIMS) - 1):
        fan_in, fan_out = DIMS[li], DIMS[li + 1]
        key, kw, kb = jax.random.split(key, 3)
        bound = 1.0 / math.sqrt(fan_in)
        w = jax.random.uniform(kw, (fan_in, fan_out), jnp.float32, -bound, bound)
        b = jax.random.uniform(kb, (fan_out,), jnp.float32, -bound, bound)
        raw.append((w, b))
    return raw


def pack_params(raw):
    """Pack f32 master params into kernel operands.

    Layers 1..6: zero-padded bf16 matmul weights + f32 (1,128) biases.
    Zero-padded weight columns/rows + zero bias padding keep padded lanes
    exactly 0 through every ReLU, preserving the PyTorch semantics.
    Layer 7 (true output width 1): f32 (1,128) weight row + (1,1) bias (VPU path).
    """
    ws, bs = [], []
    # layer 1: true K=36 (no lane padding of the input), pad out dim to 128
    w1, b1 = raw[0]
    w1p = jnp.zeros((DIMS[0], PAD), jnp.float32).at[:, : w1.shape[1]].set(w1)
    ws.append(w1p.astype(jnp.bfloat16))
    bs.append(jnp.zeros((1, PAD), jnp.float32).at[0, : b1.shape[0]].set(b1))
    # layers 2..6: pad to (128,128)
    for li in range(1, 6):
        w, b = raw[li]
        wp = jnp.zeros((PAD, PAD), jnp.float32).at[: w.shape[0], : w.shape[1]].set(w)
        ws.append(wp.astype(jnp.bfloat16))
        bs.append(jnp.zeros((1, PAD), jnp.float32).at[0, : b.shape[0]].set(b))
    # layer 7: 11 -> 1
    w7, b7 = raw[6]
    w7row = jnp.zeros((1, PAD), jnp.float32).at[0, : w7.shape[0]].set(w7[:, 0])
    b7s = b7.reshape(1, 1).astype(jnp.float32)
    return tuple(ws), tuple(bs), w7row, b7s


def mlp_kernel(x_ref,
               w1, w2, w3, w4, w5, w6,
               b1, b2, b3, b4, b5, b6,
               w7row_ref, b7_ref,
               o_ref):
    h = x_ref[...]                                    # (TB, 36) bf16
    # Unrolled hidden layers: bf16 operands, f32 accumulation (MXU);
    # bias + ReLU in f32 (VPU), then cast straight back to bf16 so only the
    # bf16 activation is materialized between layers (halves vst traffic).
    for wref, bref in zip((w1, w2, w3, w4, w5, w6),
                          (b1, b2, b3, b4, b5, b6)):
        acc = jnp.dot(h, wref[...], preferred_element_type=jnp.float32)
        h = jnp.maximum(acc + bref[...], 0.0).astype(jnp.bfloat16)
    # Final layer: true output width is 1 -> VPU multiply + lane reduction
    # instead of a 127/128-zero-column MXU matmul. Padded lanes are exact 0.
    out = jnp.sum(h.astype(jnp.float32) * w7row_ref[...], axis=-1,
                  keepdims=True) + b7_ref[...]
    o_ref[...] = out                                  # (TB, 1) f32


@jax.jit
def eas_net_forward(x, ws, bs, w7row, b7):
    """x: (B, 36) float32 -> (B, 1) float32."""
    B = x.shape[0]
    d_in = DIMS[0]
    TB, Bp = _choose_tiling(B)

    x_bf16 = x.astype(jnp.bfloat16)
    if Bp != B:
        x_pad = jnp.zeros((Bp, d_in), jnp.bfloat16).at[:B].set(x_bf16)
    else:
        x_pad = x_bf16

    grid = (Bp // TB,)
    w1_spec = pl.BlockSpec((d_in, PAD), lambda i: (0, 0))
    w_spec = pl.BlockSpec((PAD, PAD), lambda i: (0, 0))
    b_spec = pl.BlockSpec((1, PAD), lambda i: (0, 0))

    out = pl.pallas_call(
        mlp_kernel,
        out_shape=jax.ShapeDtypeStruct((Bp, 1), jnp.float32),
        grid_spec=pltpu.PrefetchScalarGridSpec(
            num_scalar_prefetch=0,
            grid=grid,
            in_specs=[pl.BlockSpec((TB, d_in), lambda i: (i, 0))]
            + [w1_spec] + [w_spec] * 5
            + [b_spec] * 6
            + [pl.BlockSpec((1, PAD), lambda i: (0, 0)),
               pl.BlockSpec((1, 1), lambda i: (0, 0))],
            out_specs=pl.BlockSpec((TB, 1), lambda i: (i, 0)),
        ),
        compiler_params=pltpu.CompilerParams(
            dimension_semantics=("parallel",),
            vmem_limit_bytes=32 * 1024 * 1024,
        ),
    )(x_pad, *ws, *bs, w7row, b7)

    # NOTE: padded batch rows (B..Bp) hold bias-driven garbage; always slice.
    return out[:B]


def reference_forward_f32(x, raw):
    """Pure f32 reference matching the PyTorch module."""
    h = x
    for li in range(6):
        w, b = raw[li]
        h = jnp.maximum(h @ w + b, 0.0)
    w, b = raw[6]
    return h @ w + b


def reference_forward_matched(x, raw):
    """Precision-matched reference (bf16 MXU operands / activations, f32 acc)."""
    h = x.astype(jnp.bfloat16)
    for li in range(6):
        w, b = raw[li]
        acc = jnp.dot(h, w.astype(jnp.bfloat16),
                      preferred_element_type=jnp.float32)
        h = jnp.maximum(acc + b, 0.0).astype(jnp.bfloat16)
    w, b = raw[6]
    return h.astype(jnp.float32) @ w + b   # final layer in f32 (VPU path)


if __name__ == "__main__":
    key = jax.random.PRNGKey(0)
    kp, kx1, kx2, kx3 = jax.random.split(key, 4)
    raw = init_raw_params(kp)
    ws, bs, w7row, b7 = pack_params(raw)

    # B=8   -> single 16-row tile (tiny-batch path, padded rows sliced off)
    # B=520 -> two balanced 264-row tiles (was 512+512 with 504 garbage rows)
    # B=1000-> two balanced 504-row tiles, both TensorCores busy on v7x
    for B, kx in ((8, kx1), (520, kx2), (1000, kx3)):
        x = jax.random.normal(kx, (B, DIMS[0]), dtype=jnp.float32)
        y = jax.block_until_ready(eas_net_forward(x, ws, bs, w7row, b7))
        assert y.shape == (B, 1), y.shape

        y_match = reference_forward_matched(x, raw)
        err_match = float(jnp.max(jnp.abs(y - y_match)))
        assert jnp.allclose(y, y_match, atol=1e-3, rtol=1e-3), err_match

        y_f32 = reference_forward_f32(x, raw)
        err_f32 = float(jnp.max(jnp.abs(y - y_f32)))
        # bf16 MXU operands/activations with f32 accumulation -> relaxed tol
        assert jnp.allclose(y, y_f32, atol=5e-2, rtol=5e-2), err_f32

    print("KERNEL_OK")
</pallas_src>

<mosaic_0001>
module attributes {stable_mosaic.version = 11 : i64} {
  func.func @mlp_kernel(%arg0: i32, %arg1: memref<16x36xbf16, #tpu.memory_space<vmem>>, %arg2: memref<36x128xbf16, #tpu.memory_space<vmem>>, %arg3: memref<128x128xbf16, #tpu.memory_space<vmem>>, %arg4: memref<128x128xbf16, #tpu.memory_space<vmem>>, %arg5: memref<128x128xbf16, #tpu.memory_space<vmem>>, %arg6: memref<128x128xbf16, #tpu.memory_space<vmem>>, %arg7: memref<128x128xbf16, #tpu.memory_space<vmem>>, %arg8: memref<1x128xf32, #tpu.memory_space<vmem>>, %arg9: memref<1x128xf32, #tpu.memory_space<vmem>>, %arg10: memref<1x128xf32, #tpu.memory_space<vmem>>, %arg11: memref<1x128xf32, #tpu.memory_space<vmem>>, %arg12: memref<1x128xf32, #tpu.memory_space<vmem>>, %arg13: memref<1x128xf32, #tpu.memory_space<vmem>>, %arg14: memref<1x128xf32, #tpu.memory_space<vmem>>, %arg15: memref<1x1xf32, #tpu.memory_space<vmem>>, %arg16: memref<16x1xf32, #tpu.memory_space<vmem>>) attributes {dimension_semantics = [#tpu.dimension_semantics<parallel>], iteration_bounds = array<i64: 1>, scalar_prefetch = 0 : i64, scratch_operands = 0 : i64, tpu.core_type = #tpu.core_type<tc>, window_params = [{transform_indices = @transform_0, window_bounds = array<i64: 16, 36>}, {pipeline_mode = #tpu.pipeline_mode<synchronous>, transform_indices = @transform_1, window_bounds = array<i64: 36, 128>}, {pipeline_mode = #tpu.pipeline_mode<synchronous>, transform_indices = @transform_2, window_bounds = array<i64: 128, 128>}, {pipeline_mode = #tpu.pipeline_mode<synchronous>, transform_indices = @transform_3, window_bounds = array<i64: 128, 128>}, {pipeline_mode = #tpu.pipeline_mode<synchronous>, transform_indices = @transform_4, window_bounds = array<i64: 128, 128>}, {pipeline_mode = #tpu.pipeline_mode<synchronous>, transform_indices = @transform_5, window_bounds = array<i64: 128, 128>}, {pipeline_mode = #tpu.pipeline_mode<synchronous>, transform_indices = @transform_6, window_bounds = array<i64: 128, 128>}, {pipeline_mode = #tpu.pipeline_mode<synchronous>, transform_indices = @transform_7, window_bounds = array<i64: 1, 128>}, {pipeline_mode = #tpu.pipeline_mode<synchronous>, transform_indices = @transform_8, window_bounds = array<i64: 1, 128>}, {pipeline_mode = #tpu.pipeline_mode<synchronous>, transform_indices = @transform_9, window_bounds = array<i64: 1, 128>}, {pipeline_mode = #tpu.pipeline_mode<synchronous>, transform_indices = @transform_10, window_bounds = array<i64: 1, 128>}, {pipeline_mode = #tpu.pipeline_mode<synchronous>, transform_indices = @transform_11, window_bounds = array<i64: 1, 128>}, {pipeline_mode = #tpu.pipeline_mode<synchronous>, transform_indices = @transform_12, window_bounds = array<i64: 1, 128>}, {pipeline_mode = #tpu.pipeline_mode<synchronous>, transform_indices = @transform_13, window_bounds = array<i64: 1, 128>}, {pipeline_mode = #tpu.pipeline_mode<synchronous>, transform_indices = @transform_14, window_bounds = array<i64: 1, 1>}, {transform_indices = @transform_15, window_bounds = array<i64: 16, 1>}]} {
    %c0 = arith.constant 0 : index
    %c0_0 = arith.constant 0 : index
    %0 = vector.load %arg1[%c0, %c0_0] : memref<16x36xbf16, #tpu.memory_space<vmem>>, vector<16x36xbf16>
    %c0_1 = arith.constant 0 : index
    %c0_2 = arith.constant 0 : index
    %1 = vector.load %arg2[%c0_1, %c0_2] : memref<36x128xbf16, #tpu.memory_space<vmem>>, vector<36x128xbf16>
    %cst = arith.constant dense<0.000000e+00> : vector<16x128xf32>
    %2 = tpu.matmul %0, %1, %cst {dimension_numbers = #tpu.dot_dimension_numbers<[1], [0], [0], [1], [0, 0, 1, 1], [], []>} : vector<16x36xbf16>, vector<36x128xbf16>, vector<16x128xf32> -> vector<16x128xf32>
    %c0_3 = arith.constant 0 : index
    %c0_4 = arith.constant 0 : index
    %3 = vector.load %arg8[%c0_3, %c0_4] : memref<1x128xf32, #tpu.memory_space<vmem>>, vector<1x128xf32>
    %4 = vector.broadcast %3 : vector<1x128xf32> to vector<16x128xf32>
    %5 = arith.addf %2, %4 : vector<16x128xf32>
    %cst_5 = arith.constant 0.000000e+00 : f32
    %6 = vector.broadcast %cst_5 : f32 to vector<16x128xf32>
    %7 = arith.maximumf %5, %6 : vector<16x128xf32>
    %8 = arith.truncf %7 : vector<16x128xf32> to vector<16x128xbf16>
    %c0_6 = arith.constant 0 : index
    %c0_7 = arith.constant 0 : index
    %9 = vector.load %arg3[%c0_6, %c0_7] : memref<128x128xbf16, #tpu.memory_space<vmem>>, vector<128x128xbf16>
    %cst_8 = arith.constant dense<0.000000e+00> : vector<16x128xf32>
    %10 = tpu.matmul %8, %9, %cst_8 {dimension_numbers = #tpu.dot_dimension_numbers<[1], [0], [0], [1], [0, 0, 1, 1], [], []>} : vector<16x128xbf16>, vector<128x128xbf16>, vector<16x128xf32> -> vector<16x128xf32>
    %c0_9 = arith.constant 0 : index
    %c0_10 = arith.constant 0 : index
    %11 = vector.load %arg9[%c0_9, %c0_10] : memref<1x128xf32, #tpu.memory_space<vmem>>, vector<1x128xf32>
    %12 = vector.broadcast %11 : vector<1x128xf32> to vector<16x128xf32>
    %13 = arith.addf %10, %12 : vector<16x128xf32>
    %cst_11 = arith.constant 0.000000e+00 : f32
    %14 = vector.broadcast %cst_11 : f32 to vector<16x128xf32>
    %15 = arith.maximumf %13, %14 : vector<16x128xf32>
    %16 = arith.truncf %15 : vector<16x128xf32> to vector<16x128xbf16>
    %c0_12 = arith.constant 0 : index
    %c0_13 = arith.constant 0 : index
    %17 = vector.load %arg4[%c0_12, %c0_13] : memref<128x128xbf16, #tpu.memory_space<vmem>>, vector<128x128xbf16>
    %cst_14 = arith.constant dense<0.000000e+00> : vector<16x128xf32>
    %18 = tpu.matmul %16, %17, %cst_14 {dimension_numbers = #tpu.dot_dimension_numbers<[1], [0], [0], [1], [0, 0, 1, 1], [], []>} : vector<16x128xbf16>, vector<128x128xbf16>, vector<16x128xf32> -> vector<16x128xf32>
    %c0_15 = arith.constant 0 : index
    %c0_16 = arith.constant 0 : index
    %19 = vector.load %arg10[%c0_15, %c0_16] : memref<1x128xf32, #tpu.memory_space<vmem>>, vector<1x128xf32>
    %20 = vector.broadcast %19 : vector<1x128xf32> to vector<16x128xf32>
    %21 = arith.addf %18, %20 : vector<16x128xf32>
    %cst_17 = arith.constant 0.000000e+00 : f32
    %22 = vector.broadcast %cst_17 : f32 to vector<16x128xf32>
    %23 = arith.maximumf %21, %22 : vector<16x128xf32>
    %24 = arith.truncf %23 : vector<16x128xf32> to vector<16x128xbf16>
    %c0_18 = arith.constant 0 : index
    %c0_19 = arith.constant 0 : index
    %25 = vector.load %arg5[%c0_18, %c0_19] : memref<128x128xbf16, #tpu.memory_space<vmem>>, vector<128x128xbf16>
    %cst_20 = arith.constant dense<0.000000e+00> : vector<16x128xf32>
    %26 = tpu.matmul %24, %25, %cst_20 {dimension_numbers = #tpu.dot_dimension_numbers<[1], [0], [0], [1], [0, 0, 1, 1], [], []>} : vector<16x128xbf16>, vector<128x128xbf16>, vector<16x128xf32> -> vector<16x128xf32>
    %c0_21 = arith.constant 0 : index
    %c0_22 = arith.constant 0 : index
    %27 = vector.load %arg11[%c0_21, %c0_22] : memref<1x128xf32, #tpu.memory_space<vmem>>, vector<1x128xf32>
    %28 = vector.broadcast %27 : vector<1x128xf32> to vector<16x128xf32>
    %29 = arith.addf %26, %28 : vector<16x128xf32>
    %cst_23 = arith.constant 0.000000e+00 : f32
    %30 = vector.broadcast %cst_23 : f32 to vector<16x128xf32>
    %31 = arith.maximumf %29, %30 : vector<16x128xf32>
    %32 = arith.truncf %31 : vector<16x128xf32> to vector<16x128xbf16>
    %c0_24 = arith.constant 0 : index
    %c0_25 = arith.constant 0 : index
    %33 = vector.load %arg6[%c0_24, %c0_25] : memref<128x128xbf16, #tpu.memory_space<vmem>>, vector<128x128xbf16>
    %cst_26 = arith.constant dense<0.000000e+00> : vector<16x128xf32>
    %34 = tpu.matmul %32, %33, %cst_26 {dimension_numbers = #tpu.dot_dimension_numbers<[1], [0], [0], [1], [0, 0, 1, 1], [], []>} : vector<16x128xbf16>, vector<128x128xbf16>, vector<16x128xf32> -> vector<16x128xf32>
    %c0_27 = arith.constant 0 : index
    %c0_28 = arith.constant 0 : index
    %35 = vector.load %arg12[%c0_27, %c0_28] : memref<1x128xf32, #tpu.memory_space<vmem>>, vector<1x128xf32>
    %36 = vector.broadcast %35 : vector<1x128xf32> to vector<16x128xf32>
    %37 = arith.addf %34, %36 : vector<16x128xf32>
    %cst_29 = arith.constant 0.000000e+00 : f32
    %38 = vector.broadcast %cst_29 : f32 to vector<16x128xf32>
    %39 = arith.maximumf %37, %38 : vector<16x128xf32>
    %40 = arith.truncf %39 : vector<16x128xf32> to vector<16x128xbf16>
    %c0_30 = arith.constant 0 : index
    %c0_31 = arith.constant 0 : index
    %41 = vector.load %arg7[%c0_30, %c0_31] : memref<128x128xbf16, #tpu.memory_space<vmem>>, vector<128x128xbf16>
    %cst_32 = arith.constant dense<0.000000e+00> : vector<16x128xf32>
    %42 = tpu.matmul %40, %41, %cst_32 {dimension_numbers = #tpu.dot_dimension_numbers<[1], [0], [0], [1], [0, 0, 1, 1], [], []>} : vector<16x128xbf16>, vector<128x128xbf16>, vector<16x128xf32> -> vector<16x128xf32>
    %c0_33 = arith.constant 0 : index
    %c0_34 = arith.constant 0 : index
    %43 = vector.load %arg13[%c0_33, %c0_34] : memref<1x128xf32, #tpu.memory_space<vmem>>, vector<1x128xf32>
    %44 = vector.broadcast %43 : vector<1x128xf32> to vector<16x128xf32>
    %45 = arith.addf %42, %44 : vector<16x128xf32>
    %cst_35 = arith.constant 0.000000e+00 : f32
    %46 = vector.broadcast %cst_35 : f32 to vector<16x128xf32>
    %47 = arith.maximumf %45, %46 : vector<16x128xf32>
    %48 = arith.truncf %47 : vector<16x128xf32> to vector<16x128xbf16>
    %49 = arith.extf %48 : vector<16x128xbf16> to vector<16x128xf32>
    %c0_36 = arith.constant 0 : index
    %c0_37 = arith.constant 0 : index
    %50 = vector.load %arg14[%c0_36, %c0_37] : memref<1x128xf32, #tpu.memory_space<vmem>>, vector<1x128xf32>
    %51 = vector.broadcast %50 : vector<1x128xf32> to vector<16x128xf32>
    %52 = arith.mulf %49, %51 : vector<16x128xf32>
    %cst_38 = arith.constant dense<0.000000e+00> : vector<16xf32>
    %53 = vector.multi_reduction <add>, %52, %cst_38 [1] : vector<16x128xf32> to vector<16xf32>
    %54 = vector.shape_cast %53 : vector<16xf32> to vector<16x1xf32>
    %c0_39 = arith.constant 0 : index
    %c0_40 = arith.constant 0 : index
    %55 = vector.load %arg15[%c0_39, %c0_40] : memref<1x1xf32, #tpu.memory_space<vmem>>, vector<1x1xf32>
    %56 = vector.broadcast %55 : vector<1x1xf32> to vector<16x1xf32>
    %57 = arith.addf %54, %56 : vector<16x1xf32>
    %c0_41 = arith.constant 0 : index
    %c0_42 = arith.constant 0 : index
    %58 = vector.load %arg16[%c0_41, %c0_42] : memref<16x1xf32, #tpu.memory_space<vmem>>, vector<16x1xf32>
    tpu.vector_store %arg16[%c0_41, %c0_42], %57 {strides = array<i32>} : memref<16x1xf32, #tpu.memory_space<vmem>>, vector<16x1xf32>,
    return
  }
  func.func @transform_0(%arg0: i32) -> (i32, i32) {
    %c0_i32 = arith.constant 0 : i32
    %c0_i32_0 = arith.constant 0 : i32
    return %arg0, %c0_i32 : i32, i32
  }
  func.func @transform_1(%arg0: i32) -> (i32, i32) {
    %c0_i32 = arith.constant 0 : i32
    %c0_i32_0 = arith.constant 0 : i32
    %c0_i32_1 = arith.constant 0 : i32
    return %c0_i32, %c0_i32_0 : i32, i32
  }
  func.func @transform_2(%arg0: i32) -> (i32, i32) {
    %c0_i32 = arith.constant 0 : i32
    %c0_i32_0 = arith.constant 0 : i32
    %c0_i32_1 = arith.constant 0 : i32
    return %c0_i32, %c0_i32_0 : i32, i32
  }
  func.func @transform_3(%arg0: i32) -> (i32, i32) {
    %c0_i32 = arith.constant 0 : i32
    %c0_i32_0 = arith.constant 0 : i32
    %c0_i32_1 = arith.constant 0 : i32
    return %c0_i32, %c0_i32_0 : i32, i32
  }
  func.func @transform_4(%arg0: i32) -> (i32, i32) {
    %c0_i32 = arith.constant 0 : i32
    %c0_i32_0 = arith.constant 0 : i32
    %c0_i32_1 = arith.constant 0 : i32
    return %c0_i32, %c0_i32_0 : i32, i32
  }
  func.func @transform_5(%arg0: i32) -> (i32, i32) {
    %c0_i32 = arith.constant 0 : i32
    %c0_i32_0 = arith.constant 0 : i32
    %c0_i32_1 = arith.constant 0 : i32
    return %c0_i32, %c0_i32_0 : i32, i32
  }
  func.func @transform_6(%arg0: i32) -> (i32, i32) {
    %c0_i32 = arith.constant 0 : i32
    %c0_i32_0 = arith.constant 0 : i32
    %c0_i32_1 = arith.constant 0 : i32
    return %c0_i32, %c0_i32_0 : i32, i32
  }
  func.func @transform_7(%arg0: i32) -> (i32, i32) {
    %c0_i32 = arith.constant 0 : i32
    %c0_i32_0 = arith.constant 0 : i32
    %c0_i32_1 = arith.constant 0 : i32
    return %c0_i32, %c0_i32_0 : i32, i32
  }
  func.func @transform_8(%arg0: i32) -> (i32, i32) {
    %c0_i32 = arith.constant 0 : i32
    %c0_i32_0 = arith.constant 0 : i32
    %c0_i32_1 = arith.constant 0 : i32
    return %c0_i32, %c0_i32_0 : i32, i32
  }
  func.func @transform_9(%arg0: i32) -> (i32, i32) {
    %c0_i32 = arith.constant 0 : i32
    %c0_i32_0 = arith.constant 0 : i32
    %c0_i32_1 = arith.constant 0 : i32
    return %c0_i32, %c0_i32_0 : i32, i32
  }
  func.func @transform_10(%arg0: i32) -> (i32, i32) {
    %c0_i32 = arith.constant 0 : i32
    %c0_i32_0 = arith.constant 0 : i32
    %c0_i32_1 = arith.constant 0 : i32
    return %c0_i32, %c0_i32_0 : i32, i32
  }
  func.func @transform_11(%arg0: i32) -> (i32, i32) {
    %c0_i32 = arith.constant 0 : i32
    %c0_i32_0 = arith.constant 0 : i32
    %c0_i32_1 = arith.constant 0 : i32
    return %c0_i32, %c0_i32_0 : i32, i32
  }
  func.func @transform_12(%arg0: i32) -> (i32, i32) {
    %c0_i32 = arith.constant 0 : i32
    %c0_i32_0 = arith.constant 0 : i32
    %c0_i32_1 = arith.constant 0 : i32
    return %c0_i32, %c0_i32_0 : i32, i32
  }
  func.func @transform_13(%arg0: i32) -> (i32, i32) {
    %c0_i32 = arith.constant 0 : i32
    %c0_i32_0 = arith.constant 0 : i32
    %c0_i32_1 = arith.constant 0 : i32
    return %c0_i32, %c0_i32_0 : i32, i32
  }
  func.func @transform_14(%arg0: i32) -> (i32, i32) {
    %c0_i32 = arith.constant 0 : i32
    %c0_i32_0 = arith.constant 0 : i32
    %c0_i32_1 = arith.constant 0 : i32
    return %c0_i32, %c0_i32_0 : i32, i32
  }
  func.func @transform_15(%arg0: i32) -> (i32, i32) {
    %c0_i32 = arith.constant 0 : i32
    %c0_i32_0 = arith.constant 0 : i32
    return %arg0, %c0_i32 : i32, i32
  }
}

</mosaic_0001>

<llo_original>
// kernel: eas_net_forward.1
$region0: #{eas_net_forward.1}
  #allocation0 [shape = 'u32[]', space=smem, size = 0x4, offset = 0x4, fixed_abs, tag = 'smem constant byte address 0x4 - core index']
  #allocation1 [shape = 'u32[72,128]{1,0:T(1,128)}', space=vmem, size = 0x9000, scoped, tag = 'internal scratch']
  #allocation2 [shape = 'f32[1,1]{1,0:T(1,128)S(1)}', space=vmem, size = 0x200, scoped, tag = 'scoped memory for eas_net_forward.1']
  %s0 = inlined_call_operand.vmem [shape: bf16[16,36], index: 0, kind: input, shape index: {}]
  %s1 = inlined_call_operand.vmem [shape: bf16[36,128], index: 1, kind: input, shape index: {}]
  %s2 = inlined_call_operand.hbm [shape: bf16[128,128], index: 2, kind: input, shape index: {}]
  %s3 = inlined_call_operand.hbm [shape: bf16[128,128], index: 3, kind: input, shape index: {}]
  %s4 = inlined_call_operand.hbm [shape: bf16[128,128], index: 4, kind: input, shape index: {}]
  %s5 = inlined_call_operand.hbm [shape: bf16[128,128], index: 5, kind: input, shape index: {}]
  %s6 = inlined_call_operand.hbm [shape: bf16[128,128], index: 6, kind: input, shape index: {}]
  %s7 = inlined_call_operand.vmem [shape: f32[1,128], index: 7, kind: input, shape index: {}]
  %s8 = inlined_call_operand.vmem [shape: f32[1,128], index: 8, kind: input, shape index: {}]
  %s9 = inlined_call_operand.vmem [shape: f32[1,128], index: 9, kind: input, shape index: {}]
  %s10 = inlined_call_operand.vmem [shape: f32[1,128], index: 10, kind: input, shape index: {}]
  %s11 = inlined_call_operand.vmem [shape: f32[1,128], index: 11, kind: input, shape index: {}]
  %s12 = inlined_call_operand.vmem [shape: f32[1,128], index: 12, kind: input, shape index: {}]
  %s13 = inlined_call_operand.vmem [shape: f32[1,128], index: 13, kind: input, shape index: {}]
  %s14 = inlined_call_operand.<no memory space> [shape: f32[1,1], index: 14, kind: input, shape index: {}]
  %s15 = inlined_call_operand.vmem [shape: f32[16,1], index: 15, kind: output, shape index: {}]
  %s16 = sld [smem:[#allocation0]]
  $region90: #{eas_net_forward.1} parent=0
    _
  %s18 = ssub.s32 1, %s16
  %s19 = scalar_select 0, %s18, %s16
  %v20 = vstv %s14
  %21 = vst [vmem:[#allocation2] sm:$0x1] %v20
  $region1: #{eas_net_forward.1} parent=0
    #allocation3 [shape = 'u8[32768]{0}', space=vmem, size = 0x8000, scoped, tag = 'input window, operand 2, single buffered']
    #allocation4 [shape = 's32[1]{0}', space=sflag, size = 0x4, scoped, tag = 'scoped memory for eas_net_forward.1']
    #allocation5 [shape = 'u8[32768]{0}', space=vmem, size = 0x8000, scoped, tag = 'input window, operand 3, single buffered']
    #allocation6 [shape = 's32[1]{0}', space=sflag, size = 0x4, scoped, tag = 'scoped memory for eas_net_forward.1']
    #allocation7 [shape = 'u8[32768]{0}', space=vmem, size = 0x8000, scoped, tag = 'input window, operand 4, single buffered']
    #allocation8 [shape = 'u8[32768]{0}', space=vmem, size = 0x8000, scoped, tag = 'input window, operand 5, single buffered']
    #allocation9 [shape = 's32[1]{0}', space=sflag, size = 0x4, scoped, tag = 'scoped memory for eas_net_forward.1']
    #allocation10 [shape = 'u8[32768]{0}', space=vmem, size = 0x8000, scoped, tag = 'input window, operand 6, single buffered']
    %22 = vsyncpa [#allocation4], 0
    %23 = vsyncpa [#allocation6], 0
    %24 = vsyncpa [#allocation9], 0
    // Predicated region
    $region2: #{eas_net_forward.1} parent=1 // pred_check
      _
    $region3: #{eas_net_forward.1} parent=1 // pred_check_branch
      %26 = sbr.rel (0) target = $region5
    $region4: #{eas_net_forward.1} parent=1 // pred_region
      _
    $region5: #{eas_net_forward.1} parent=1 // pred_fallthru
      _
    // Predicated region
    $region6: #{eas_net_forward.1} parent=1 // pred_check
      _
    $region7: #{eas_net_forward.1} parent=1 // pred_check_branch
      %28 = sbr.rel (0) target = $region9
    $region8: #{eas_net_forward.1} parent=1 // pred_region
      _
    $region9: #{eas_net_forward.1} parent=1 // pred_fallthru
      _
    // Predicated region
    $region10: #{eas_net_forward.1} parent=1 // pred_check
      _
    $region11: #{eas_net_forward.1} parent=1 // pred_check_branch
      %30 = sbr.rel (0) target = $region13
    $region12: #{eas_net_forward.1} parent=1 // pred_region
      %32 = vsyncadd [#allocation4], 0
      %s33 = sshll.u32 %s2, 4
      %s34 = int_to_ptr.hbm [resolvable:$true] %s33
      %s35 = sshll.u32 [#allocation3], 4
      %s36 = int_to_ptr.vmem [resolvable:$true] %s35
      %41 = dma.hbm_to_vmem [thread:$0]  %s34, 1024, %s36, [#allocation4], 64, 64, 4
    $region13: #{eas_net_forward.1} parent=1 // pred_fallthru
      _
    // Predicated region
    $region14: #{eas_net_forward.1} parent=1 // pred_check
      _
    $region15: #{eas_net_forward.1} parent=1 // pred_check_branch
      %43 = sbr.rel (0) target = $region17
    $region16: #{eas_net_forward.1} parent=1 // pred_region
      %45 = vsyncadd [#allocation6], 0
      %s46 = sshll.u32 %s3, 4
      %s47 = int_to_ptr.hbm [resolvable:$true] %s46
      %s48 = sshll.u32 [#allocation5], 4
      %s49 = int_to_ptr.vmem [resolvable:$true] %s48
      %54 = dma.hbm_to_vmem [thread:$0]  %s47, 1024, %s49, [#allocation6], 64, 64, 4
    $region17: #{eas_net_forward.1} parent=1 // pred_fallthru
      _
    // Predicated region
    $region18: #{eas_net_forward.1} parent=1 // pred_check
      _
    $region19: #{eas_net_forward.1} parent=1 // pred_check_branch
      %56 = sbr.rel (0) target = $region21
    $region20: #{eas_net_forward.1} parent=1 // pred_region
      %58 = vsyncadd [#allocation6], 0
      %s59 = sshll.u32 %s4, 4
      %s60 = int_to_ptr.hbm [resolvable:$true] %s59
      %s61 = sshll.u32 [#allocation7], 4
      %s62 = int_to_ptr.vmem [resolvable:$true] %s61
      %67 = dma.hbm_to_vmem [thread:$0]  %s60, 1024, %s62, [#allocation6], 64, 64, 4
    $region21: #{eas_net_forward.1} parent=1 // pred_fallthru
      _
    // Predicated region
    $region22: #{eas_net_forward.1} parent=1 // pred_check
      _
    $region23: #{eas_net_forward.1} parent=1 // pred_check_branch
      %69 = sbr.rel (0) target = $region25
    $region24: #{eas_net_forward.1} parent=1 // pred_region
      %71 = vsyncadd [#allocation9], 0
      %s72 = sshll.u32 %s5, 4
      %s73 = int_to_ptr.hbm [resolvable:$true] %s72
      %s74 = sshll.u32 [#allocation8], 4
      %s75 = int_to_ptr.vmem [resolvable:$true] %s74
      %80 = dma.hbm_to_vmem [thread:$0]  %s73, 1024, %s75, [#allocation9], 64, 64, 4
    $region25: #{eas_net_forward.1} parent=1 // pred_fallthru
      _
    // Predicated region
    $region26: #{eas_net_forward.1} parent=1 // pred_check
      _
    $region27: #{eas_net_forward.1} parent=1 // pred_check_branch
      %82 = sbr.rel (0) target = $region29
    $region28: #{eas_net_forward.1} parent=1 // pred_region
      %84 = vsyncadd [#allocation9], 0
      %s85 = sshll.u32 %s6, 4
      %s86 = int_to_ptr.hbm [resolvable:$true] %s85
      %s87 = sshll.u32 [#allocation10], 4
      %s88 = int_to_ptr.vmem [resolvable:$true] %s87
      %93 = dma.hbm_to_vmem [thread:$0]  %s86, 1024, %s88, [#allocation9], 64, 64, 4
    $region29: #{eas_net_forward.1} parent=1 // pred_fallthru
      _
    // Predicated region
    $region30: #{eas_net_forward.1} parent=1 // pred_check
      _
    $region31: #{eas_net_forward.1} parent=1 // pred_check_branch
      %95 = sbr.rel (0) target = $region33
    $region32: #{eas_net_forward.1} parent=1 // pred_region
      _
    $region33: #{eas_net_forward.1} parent=1 // pred_fallthru
      _
    // Predicated region
    $region34: #{eas_net_forward.1} parent=1 // pred_check
      _
    $region35: #{eas_net_forward.1} parent=1 // pred_check_branch
      %97 = sbr.rel (0) target = $region37
    $region36: #{eas_net_forward.1} parent=1 // pred_region
      _
    $region37: #{eas_net_forward.1} parent=1 // pred_fallthru
      _
    // Predicated region
    $region38: #{eas_net_forward.1} parent=1 // pred_check
      _
    $region39: #{eas_net_forward.1} parent=1 // pred_check_branch
      %99 = sbr.rel (0) target = $region41
    $region40: #{eas_net_forward.1} parent=1 // pred_region
      _
    $region41: #{eas_net_forward.1} parent=1 // pred_fallthru
      _
    // Predicated region
    $region42: #{eas_net_forward.1} parent=1 // pred_check
      _
    $region43: #{eas_net_forward.1} parent=1 // pred_check_branch
      %101 = sbr.rel (0) target = $region45
    $region44: #{eas_net_forward.1} parent=1 // pred_region
      _
    $region45: #{eas_net_forward.1} parent=1 // pred_fallthru
      _
    // Predicated region
    $region46: #{eas_net_forward.1} parent=1 // pred_check
      _
    $region47: #{eas_net_forward.1} parent=1 // pred_check_branch
      %103 = sbr.rel (0) target = $region49
    $region48: #{eas_net_forward.1} parent=1 // pred_region
      _
    $region49: #{eas_net_forward.1} parent=1 // pred_fallthru
      _
    // Predicated region
    $region50: #{eas_net_forward.1} parent=1 // pred_check
      _
    $region51: #{eas_net_forward.1} parent=1 // pred_check_branch
      %105 = sbr.rel (0) target = $region53
    $region52: #{eas_net_forward.1} parent=1 // pred_region
      _
    $region53: #{eas_net_forward.1} parent=1 // pred_fallthru
      _
    // Predicated region
    $region54: #{eas_net_forward.1} parent=1 // pred_check
      _
    $region55: #{eas_net_forward.1} parent=1 // pred_check_branch
      %107 = sbr.rel (0) target = $region57
    $region56: #{eas_net_forward.1} parent=1 // pred_region
      _
    $region57: #{eas_net_forward.1} parent=1 // pred_fallthru
      _
    // Predicated region
    $region58: #{eas_net_forward.1} parent=1 // pred_check
      _
    $region59: #{eas_net_forward.1} parent=1 // pred_check_branch
      %109 = sbr.rel (0) target = $region61
    $region60: #{eas_net_forward.1} parent=1 // pred_region
      _
    $region61: #{eas_net_forward.1} parent=1 // pred_fallthru
      _
    // Predicated region
    $region62: #{eas_net_forward.1} parent=1 // pred_check
      _
    $region63: #{eas_net_forward.1} parent=1 // pred_check_branch
      %111 = sbr.rel (0) target = $region65
    $region64: #{eas_net_forward.1} parent=1 // pred_region
      %113 = dma.done [#allocation4], 1024
    $region65: #{eas_net_forward.1} parent=1 // pred_fallthru
      _
    // Predicated region
    $region66: #{eas_net_forward.1} parent=1 // pred_check
      _
    $region67: #{eas_net_forward.1} parent=1 // pred_check_branch
      %115 = sbr.rel (0) target = $region69
    $region68: #{eas_net_forward.1} parent=1 // pred_region
      %117 = dma.done [#allocation6], 1024
    $region69: #{eas_net_forward.1} parent=1 // pred_fallthru
      _
    // Predicated region
    $region70: #{eas_net_forward.1} parent=1 // pred_check
      _
    $region71: #{eas_net_forward.1} parent=1 // pred_check_branch
      %119 = sbr.rel (0) target = $region73
    $region72: #{eas_net_forward.1} parent=1 // pred_region
      %121 = dma.done [#allocation6], 1024
    $region73: #{eas_net_forward.1} parent=1 // pred_fallthru
      _
    // Predicated region
    $region74: #{eas_net_forward.1} parent=1 // pred_check
      _
    $region75: #{eas_net_forward.1} parent=1 // pred_check_branch
      %123 = sbr.rel (0) target = $region77
    $region76: #{eas_net_forward.1} parent=1 // pred_region
      %125 = dma.done [#allocation9], 1024
    $region77: #{eas_net_forward.1} parent=1 // pred_fallthru
      _
    // Predicated region
    $region78: #{eas_net_forward.1} parent=1 // pred_check
      _
    $region79: #{eas_net_forward.1} parent=1 // pred_check_branch
      %127 = sbr.rel (0) target = $region81
    $region80: #{eas_net_forward.1} parent=1 // pred_region
      %129 = dma.done [#allocation9], 1024
    $region81: #{eas_net_forward.1} parent=1 // pred_fallthru
      _
    %v131 = vld [vmem:[%s0] sm:$0xf]
    %v132 = vld [vmem:[%s0 + $0x4] sm:$0xf]
    %v133 = vld [vmem:[%s1] sm:$0xf]
    %v134 = vld [vmem:[%s1 + $0x4] sm:$0xf]
    %v135 = vld [vmem:[%s1 + $0x8] sm:$0xf]
    %v136 = vld [vmem:[%s1 + $0xc] sm:$0xf]
    %v137 = vld [vmem:[%s1 + $0x10] sm:$0x3]
    %v138 = vld [vmem:[%s7] sm:$0x1]
    %v140 = vperm.slane %v138, 0
    %v144 = vunpack.c.l.b16 %v131
    %v145 = vunpack.c.l.b16 %v132
    %v146 = vpack.c.b16 %v145, %v144
    %v152 = vunpack.c.l.b16 %v133
    %v153 = vunpack.c.l.b16 %v134
    %v154 = vunpack.c.l.b16 %v135
    %v155 = vunpack.c.l.b16 %v136
    %v156 = vunpack.c.l.b16 %v137
    %v157 = vpack.c.b16 %v153, %v152
    %v158 = vpack.c.b16 %v155, %v154
    %v159 = vpack.c.b16 %v156, %v156
    %vm162 = vcmask 293888
    %v164 = vsel %vm162, %v146, 0
    %vm166 = vcmask 1041408
    %v168 = vsel %vm166, %v159, 0
    %170 = vmatpush.bf16.msra.mxu0 0
    %171 = vmatpush.bf16.msra.mxu0 0
    %172 = vmatpush.bf16.msra.mxu0 0
    %173 = vmatpush.bf16.msra.mxu0 0
    %174 = vmatpush.bf16.msra.mxu0 0
    %175 = vmatpush.bf16.msra.mxu0 %v168
    %176 = vmatpush.bf16.msra.mxu0 %v158
    %177 = vmatpush.bf16.msra.mxu0 %v157
    %178 = vmatmul.bf16.gmra.mxu0 %v164
    %v179 = vpop.f32.mrf.mxu0
    %v180 = vadd.f32 %v140, %v179
    %v181 = vpop.f32.mrf.mxu0
    %v182 = vadd.f32 %v140, %v181
    %183 = vdwg.mxu0
    %v184 = vmax.f32 %v180, 0.0
    %v185 = vmax.f32 %v182, 0.0
    %v186 = vpack.c.bf16 %v185, %v184
    %v187 = vld [vmem:[#allocation3] sm:$0xf]
    %v188 = vld [vmem:[#allocation3 + $0x4] sm:$0xf]
    %v189 = vld [vmem:[#allocation3 + $0x8] sm:$0xf]
    %v190 = vld [vmem:[#allocation3 + $0xc] sm:$0xf]
    %v191 = vld [vmem:[#allocation3 + $0x10] sm:$0xf]
    %v192 = vld [vmem:[#allocation3 + $0x14] sm:$0xf]
    %v193 = vld [vmem:[#allocation3 + $0x18] sm:$0xf]
    %v194 = vld [vmem:[#allocation3 + $0x1c] sm:$0xf]
    %v195 = vld [vmem:[#allocation3 + $0x20] sm:$0xf]
    %v196 = vld [vmem:[#allocation3 + $0x24] sm:$0xf]
    %v197 = vld [vmem:[#allocation3 + $0x28] sm:$0xf]
    %v198 = vld [vmem:[#allocation3 + $0x2c] sm:$0xf]
    %v199 = vld [vmem:[#allocation3 + $0x30] sm:$0xf]
    %v200 = vld [vmem:[#allocation3 + $0x34] sm:$0xf]
    %v201 = vld [vmem:[#allocation3 + $0x38] sm:$0xf]
    %v202 = vld [vmem:[#allocation3 + $0x3c] sm:$0xf]
    %v203 = vld [vmem:[%s8] sm:$0x1]
    %v205 = vperm.slane %v203, 0
    %v223 = vunpack.c.l.b16 %v187
    %v224 = vunpack.c.l.b16 %v188
    %v225 = vunpack.c.l.b16 %v189
    %v226 = vunpack.c.l.b16 %v190
    %v227 = vunpack.c.l.b16 %v191
    %v228 = vunpack.c.l.b16 %v192
    %v229 = vunpack.c.l.b16 %v193
    %v230 = vunpack.c.l.b16 %v194
    %v231 = vunpack.c.l.b16 %v195
    %v232 = vunpack.c.l.b16 %v196
    %v233 = vunpack.c.l.b16 %v197
    %v234 = vunpack.c.l.b16 %v198
    %v235 = vunpack.c.l.b16 %v199
    %v236 = vunpack.c.l.b16 %v200
    %v237 = vunpack.c.l.b16 %v201
    %v238 = vunpack.c.l.b16 %v202
    %v239 = vpack.c.b16 %v224, %v223
    %v240 = vpack.c.b16 %v226, %v225
    %v241 = vpack.c.b16 %v228, %v227
    %v242 = vpack.c.b16 %v230, %v229
    %v243 = vpack.c.b16 %v232, %v231
    %v244 = vpack.c.b16 %v234, %v233
    %v245 = vpack.c.b16 %v236, %v235
    %v246 = vpack.c.b16 %v238, %v237
    %255 = vmatpush.bf16.msra.mxu0 %v246
    %256 = vmatpush.bf16.msra.mxu0 %v245
    %257 = vmatpush.bf16.msra.mxu0 %v244
    %258 = vmatpush.bf16.msra.mxu0 %v243
    %259 = vmatpush.bf16.msra.mxu0 %v242
    %260 = vmatpush.bf16.msra.mxu0 %v241
    %261 = vmatpush.bf16.msra.mxu0 %v240
    %262 = vmatpush.bf16.msra.mxu0 %v239
    %263 = vmatmul.bf16.gmra.mxu0 %v186
    %v264 = vpop.f32.mrf.mxu0
    %v265 = vadd.f32 %v205, %v264
    %v266 = vpop.f32.mrf.mxu0
    %v267 = vadd.f32 %v205, %v266
    %268 = vdwg.mxu0
    %v269 = vmax.f32 %v265, 0.0
    %v270 = vmax.f32 %v267, 0.0
    %v271 = vpack.c.bf16 %v270, %v269
    %v272 = vld [vmem:[#allocation5] sm:$0xf]
    %v273 = vld [vmem:[#allocation5 + $0x4] sm:$0xf]
    %v274 = vld [vmem:[#allocation5 + $0x8] sm:$0xf]
    %v275 = vld [vmem:[#allocation5 + $0xc] sm:$0xf]
    %v276 = vld [vmem:[#allocation5 + $0x10] sm:$0xf]
    %v277 = vld [vmem:[#allocation5 + $0x14] sm:$0xf]
    %v278 = vld [vmem:[#allocation5 + $0x18] sm:$0xf]
    %v279 = vld [vmem:[#allocation5 + $0x1c] sm:$0xf]
    %v280 = vld [vmem:[#allocation5 + $0x20] sm:$0xf]
    %v281 = vld [vmem:[#allocation5 + $0x24] sm:$0xf]
    %v282 = vld [vmem:[#allocation5 + $0x28] sm:$0xf]
    %v283 = vld [vmem:[#allocation5 + $0x2c] sm:$0xf]
    %v284 = vld [vmem:[#allocation5 + $0x30] sm:$0xf]
    %v285 = vld [vmem:[#allocation5 + $0x34] sm:$0xf]
    %v286 = vld [vmem:[#allocation5 + $0x38] sm:$0xf]
    %v287 = vld [vmem:[#allocation5 + $0x3c] sm:$0xf]
    %v288 = vld [vmem:[%s9] sm:$0x1]
    %v290 = vperm.slane %v288, 0
    %v308 = vunpack.c.l.b16 %v272
    %v309 = vunpack.c.l.b16 %v273
    %v310 = vunpack.c.l.b16 %v274
    %v311 = vunpack.c.l.b16 %v275
    %v312 = vunpack.c.l.b16 %v276
    %v313 = vunpack.c.l.b16 %v277
    %v314 = vunpack.c.l.b16 %v278
    %v315 = vunpack.c.l.b16 %v279
    %v316 = vunpack.c.l.b16 %v280
    %v317 = vunpack.c.l.b16 %v281
    %v318 = vunpack.c.l.b16 %v282
    %v319 = vunpack.c.l.b16 %v283
    %v320 = vunpack.c.l.b16 %v284
    %v321 = vunpack.c.l.b16 %v285
    %v322 = vunpack.c.l.b16 %v286
    %v323 = vunpack.c.l.b16 %v287
    %v324 = vpack.c.b16 %v309, %v308
    %v325 = vpack.c.b16 %v311, %v310
    %v326 = vpack.c.b16 %v313, %v312
    %v327 = vpack.c.b16 %v315, %v314
    %v328 = vpack.c.b16 %v317, %v316
    %v329 = vpack.c.b16 %v319, %v318
    %v330 = vpack.c.b16 %v321, %v320
    %v331 = vpack.c.b16 %v323, %v322
    %340 = vmatpush.bf16.msra.mxu0 %v331
    %341 = vmatpush.bf16.msra.mxu0 %v330
    %342 = vmatpush.bf16.msra.mxu0 %v329
    %343 = vmatpush.bf16.msra.mxu0 %v328
    %344 = vmatpush.bf16.msra.mxu0 %v327
    %345 = vmatpush.bf16.msra.mxu0 %v326
    %346 = vmatpush.bf16.msra.mxu0 %v325
    %347 = vmatpush.bf16.msra.mxu0 %v324
    %348 = vmatmul.bf16.gmra.mxu0 %v271
    %v349 = vpop.f32.mrf.mxu0
    %v350 = vadd.f32 %v290, %v349
    %v351 = vpop.f32.mrf.mxu0
    %v352 = vadd.f32 %v290, %v351
    %353 = vdwg.mxu0
    %v354 = vmax.f32 %v350, 0.0
    %v355 = vmax.f32 %v352, 0.0
    %v356 = vpack.c.bf16 %v355, %v354
    %v357 = vld [vmem:[#allocation7] sm:$0xf]
    %v358 = vld [vmem:[#allocation7 + $0x4] sm:$0xf]
    %v359 = vld [vmem:[#allocation7 + $0x8] sm:$0xf]
    %v360 = vld [vmem:[#allocation7 + $0xc] sm:$0xf]
    %v361 = vld [vmem:[#allocation7 + $0x10] sm:$0xf]
    %v362 = vld [vmem:[#allocation7 + $0x14] sm:$0xf]
    %v363 = vld [vmem:[#allocation7 + $0x18] sm:$0xf]
    %v364 = vld [vmem:[#allocation7 + $0x1c] sm:$0xf]
    %v365 = vld [vmem:[#allocation7 + $0x20] sm:$0xf]
    %v366 = vld [vmem:[#allocation7 + $0x24] sm:$0xf]
    %v367 = vld [vmem:[#allocation7 + $0x28] sm:$0xf]
    %v368 = vld [vmem:[#allocation7 + $0x2c] sm:$0xf]
    %v369 = vld [vmem:[#allocation7 + $0x30] sm:$0xf]
    %v370 = vld [vmem:[#allocation7 + $0x34] sm:$0xf]
    %v371 = vld [vmem:[#allocation7 + $0x38] sm:$0xf]
    %v372 = vld [vmem:[#allocation7 + $0x3c] sm:$0xf]
    %v373 = vld [vmem:[%s10] sm:$0x1]
    %v375 = vperm.slane %v373, 0
    %v393 = vunpack.c.l.b16 %v357
    %v394 = vunpack.c.l.b16 %v358
    %v395 = vunpack.c.l.b16 %v359
    %v396 = vunpack.c.l.b16 %v360
    %v397 = vunpack.c.l.b16 %v361
    %v398 = vunpack.c.l.b16 %v362
    %v399 = vunpack.c.l.b16 %v363
    %v400 = vunpack.c.l.b16 %v364
    %v401 = vunpack.c.l.b16 %v365
    %v402 = vunpack.c.l.b16 %v366
    %v403 = vunpack.c.l.b16 %v367
    %v404 = vunpack.c.l.b16 %v368
    %v405 = vunpack.c.l.b16 %v369
    %v406 = vunpack.c.l.b16 %v370
    %v407 = vunpack.c.l.b16 %v371
    %v408 = vunpack.c.l.b16 %v372
    %v409 = vpack.c.b16 %v394, %v393
    %v410 = vpack.c.b16 %v396, %v395
    %v411 = vpack.c.b16 %v398, %v397
    %v412 = vpack.c.b16 %v400, %v399
    %v413 = vpack.c.b16 %v402, %v401
    %v414 = vpack.c.b16 %v404, %v403
    %v415 = vpack.c.b16 %v406, %v405
    %v416 = vpack.c.b16 %v408, %v407
    %425 = vmatpush.bf16.msra.mxu0 %v416
    %426 = vmatpush.bf16.msra.mxu0 %v415
    %427 = vmatpush.bf16.msra.mxu0 %v414
    %428 = vmatpush.bf16.msra.mxu0 %v413
    %429 = vmatpush.bf16.msra.mxu0 %v412
    %430 = vmatpush.bf16.msra.mxu0 %v411
    %431 = vmatpush.bf16.msra.mxu0 %v410
    %432 = vmatpush.bf16.msra.mxu0 %v409
    %433 = vmatmul.bf16.gmra.mxu0 %v356
    %v434 = vpop.f32.mrf.mxu0
    %v435 = vadd.f32 %v375, %v434
    %v436 = vpop.f32.mrf.mxu0
    %v437 = vadd.f32 %v375, %v436
    %438 = vdwg.mxu0
    %v439 = vmax.f32 %v435, 0.0
    %v440 = vmax.f32 %v437, 0.0
    %v441 = vpack.c.bf16 %v440, %v439
    %v442 = vld [vmem:[#allocation8] sm:$0xf]
    %v443 = vld [vmem:[#allocation8 + $0x4] sm:$0xf]
    %v444 = vld [vmem:[#allocation8 + $0x8] sm:$0xf]
    %v445 = vld [vmem:[#allocation8 + $0xc] sm:$0xf]
    %v446 = vld [vmem:[#allocation8 + $0x10] sm:$0xf]
    %v447 = vld [vmem:[#allocation8 + $0x14] sm:$0xf]
    %v448 = vld [vmem:[#allocation8 + $0x18] sm:$0xf]
    %v449 = vld [vmem:[#allocation8 + $0x1c] sm:$0xf]
    %v450 = vld [vmem:[#allocation8 + $0x20] sm:$0xf]
    %v451 = vld [vmem:[#allocation8 + $0x24] sm:$0xf]
    %v452 = vld [vmem:[#allocation8 + $0x28] sm:$0xf]
    %v453 = vld [vmem:[#allocation8 + $0x2c] sm:$0xf]
    %v454 = vld [vmem:[#allocation8 + $0x30] sm:$0xf]
    %v455 = vld [vmem:[#allocation8 + $0x34] sm:$0xf]
    %v456 = vld [vmem:[#allocation8 + $0x38] sm:$0xf]
    %v457 = vld [vmem:[#allocation8 + $0x3c] sm:$0xf]
    %v458 = vld [vmem:[%s11] sm:$0x1]
    %v460 = vperm.slane %v458, 0
    %v478 = vunpack.c.l.b16 %v442
    %v479 = vunpack.c.l.b16 %v443
    %v480 = vunpack.c.l.b16 %v444
    %v481 = vunpack.c.l.b16 %v445
    %v482 = vunpack.c.l.b16 %v446
    %v483 = vunpack.c.l.b16 %v447
    %v484 = vunpack.c.l.b16 %v448
    %v485 = vunpack.c.l.b16 %v449
    %v486 = vunpack.c.l.b16 %v450
    %v487 = vunpack.c.l.b16 %v451
    %v488 = vunpack.c.l.b16 %v452
    %v489 = vunpack.c.l.b16 %v453
    %v490 = vunpack.c.l.b16 %v454
    %v491 = vunpack.c.l.b16 %v455
    %v492 = vunpack.c.l.b16 %v456
    %v493 = vunpack.c.l.b16 %v457
    %v494 = vpack.c.b16 %v479, %v478
    %v495 = vpack.c.b16 %v481, %v480
    %v496 = vpack.c.b16 %v483, %v482
    %v497 = vpack.c.b16 %v485, %v484
    %v498 = vpack.c.b16 %v487, %v486
    %v499 = vpack.c.b16 %v489, %v488
    %v500 = vpack.c.b16 %v491, %v490
    %v501 = vpack.c.b16 %v493, %v492
    %510 = vmatpush.bf16.msra.mxu0 %v501
    %511 = vmatpush.bf16.msra.mxu0 %v500
    %512 = vmatpush.bf16.msra.mxu0 %v499
    %513 = vmatpush.bf16.msra.mxu0 %v498
    %514 = vmatpush.bf16.msra.mxu0 %v497
    %515 = vmatpush.bf16.msra.mxu0 %v496
    %516 = vmatpush.bf16.msra.mxu0 %v495
    %517 = vmatpush.bf16.msra.mxu0 %v494
    %518 = vmatmul.bf16.gmra.mxu0 %v441
    %v519 = vpop.f32.mrf.mxu0
    %v520 = vadd.f32 %v460, %v519
    %v521 = vpop.f32.mrf.mxu0
    %v522 = vadd.f32 %v460, %v521
    %523 = vdwg.mxu0
    %v524 = vmax.f32 %v520, 0.0
    %v525 = vmax.f32 %v522, 0.0
    %v526 = vpack.c.bf16 %v525, %v524
    %v527 = vld [vmem:[#allocation10] sm:$0xf]
    %v528 = vld [vmem:[#allocation10 + $0x4] sm:$0xf]
    %v529 = vld [vmem:[#allocation10 + $0x8] sm:$0xf]
    %v530 = vld [vmem:[#allocation10 + $0xc] sm:$0xf]
    %v531 = vld [vmem:[#allocation10 + $0x10] sm:$0xf]
    %v532 = vld [vmem:[#allocation10 + $0x14] sm:$0xf]
    %v533 = vld [vmem:[#allocation10 + $0x18] sm:$0xf]
    %v534 = vld [vmem:[#allocation10 + $0x1c] sm:$0xf]
    %v535 = vld [vmem:[#allocation10 + $0x20] sm:$0xf]
    %v536 = vld [vmem:[#allocation10 + $0x24] sm:$0xf]
    %v537 = vld [vmem:[#allocation10 + $0x28] sm:$0xf]
    %v538 = vld [vmem:[#allocation10 + $0x2c] sm:$0xf]
    %v539 = vld [vmem:[#allocation10 + $0x30] sm:$0xf]
    %v540 = vld [vmem:[#allocation10 + $0x34] sm:$0xf]
    %v541 = vld [vmem:[#allocation10 + $0x38] sm:$0xf]
    %v542 = vld [vmem:[#allocation10 + $0x3c] sm:$0xf]
    %v543 = vld [vmem:[%s12] sm:$0x1]
    %v545 = vperm.slane %v543, 0
    %v563 = vunpack.c.l.b16 %v527
    %v564 = vunpack.c.l.b16 %v528
    %v565 = vunpack.c.l.b16 %v529
    %v566 = vunpack.c.l.b16 %v530
    %v567 = vunpack.c.l.b16 %v531
    %v568 = vunpack.c.l.b16 %v532
    %v569 = vunpack.c.l.b16 %v533
    %v570 = vunpack.c.l.b16 %v534
    %v571 = vunpack.c.l.b16 %v535
    %v572 = vunpack.c.l.b16 %v536
    %v573 = vunpack.c.l.b16 %v537
    %v574 = vunpack.c.l.b16 %v538
    %v575 = vunpack.c.l.b16 %v539
    %v576 = vunpack.c.l.b16 %v540
    %v577 = vunpack.c.l.b16 %v541
    %v578 = vunpack.c.l.b16 %v542
    %v579 = vpack.c.b16 %v564, %v563
    %v580 = vpack.c.b16 %v566, %v565
    %v581 = vpack.c.b16 %v568, %v567
    %v582 = vpack.c.b16 %v570, %v569
    %v583 = vpack.c.b16 %v572, %v571
    %v584 = vpack.c.b16 %v574, %v573
    %v585 = vpack.c.b16 %v576, %v575
    %v586 = vpack.c.b16 %v578, %v577
    %595 = vmatpush.bf16.msra.mxu0 %v586
    %596 = vmatpush.bf16.msra.mxu0 %v585
    %597 = vmatpush.bf16.msra.mxu0 %v584
    %598 = vmatpush.bf16.msra.mxu0 %v583
    %599 = vmatpush.bf16.msra.mxu0 %v582
    %600 = vmatpush.bf16.msra.mxu0 %v581
    %601 = vmatpush.bf16.msra.mxu0 %v580
    %602 = vmatpush.bf16.msra.mxu0 %v579
    %603 = vmatmul.bf16.gmra.mxu0 %v526
    %v604 = vpop.f32.mrf.mxu0
    %v605 = vadd.f32 %v545, %v604
    %v606 = vpop.f32.mrf.mxu0
    %v607 = vadd.f32 %v545, %v606
    %608 = vdwg.mxu0
    %v609 = vmax.f32 %v605, 0.0
    %v610 = vmax.f32 %v607, 0.0
    %v611 = vpack.c.bf16 %v609, %v609
    %v612 = vpack.c.bf16 %v610, %v610
    %v613 = vunpack.c.l.bf16 %v611
    %v614 = vunpack.c.l.bf16 %v612
    %v615 = vld [vmem:[%s13] sm:$0x1]
    %v617 = vperm.slane %v615, 0
    %v619 = vmul.f32 %v613, %v617
    %v620 = vmul.f32 %v614, %v617
    %621 = vadd.xlane.f32.xlu0 %v619
    %v622 = vpop.xlane.xlu0 %621
    %623 = vadd.xlane.f32.xlu0 %v620
    %v624 = vpop.xlane.xlu0 %623
    %v625 = vld [vmem:[#allocation2] sm:$0x1]
    %v627 = vperm.slane %v625, 0
    %v629 = vadd.f32 %v622, %v627
    %v630 = vadd.f32 %v624, %v627
    %vm631 = vcmask 7168
    %632 = vst.msk [vmem:[%s15] sm:$0xff] %vm631, %v629
    %633 = vst.msk [vmem:[%s15 + $0x8] sm:$0xff] %vm631, %v630
    // Predicated region
    $region82: #{eas_net_forward.1} parent=1 // pred_check
      _
    $region83: #{eas_net_forward.1} parent=1 // pred_check_branch
      %635 = sbr.rel (0) target = $region85
    $region84: #{eas_net_forward.1} parent=1 // pred_region
      _
    $region85: #{eas_net_forward.1} parent=1 // pred_fallthru
      _
    // Predicated region
    $region86: #{eas_net_forward.1} parent=1 // pred_check
      _
    $region87: #{eas_net_forward.1} parent=1 // pred_check_branch
      %637 = sbr.rel (0) target = $region89
    $region88: #{eas_net_forward.1} parent=1 // pred_region
      _
    $region89: #{eas_net_forward.1} parent=1 // pred_fallthru
      _
    %638 = vsyncpa [#allocation4], 1
    %639 = vsyncpa [#allocation6], 1
    %640 = vsyncpa [#allocation9], 1

</llo_original>
